<compile_context>
chip_gen: v7x
topology: tpu7x:2x2x1
jax: 0.10.0
libtpu: 0.0.40
codegen_flags: <defaults>
</compile_context>

<pallas_src>
import functools

import jax
import jax.numpy as jnp
from jax.experimental import pallas as pl
from jax.experimental.pallas import tpu as pltpu

EPS = 1e-5


def _round_up(x, m):
    return (x + m - 1) // m * m


def _pick_c_tile(c, n, hw_padded, itemsize=4, max_block_bytes=2 << 20, min_grid=8):
    """Largest multiple-of-8 divisor of `c` that (a) keeps the grid >= min_grid steps
    and (b) keeps one (n, c_tile, hw_padded) block under max_block_bytes.  Falls back
    gracefully when `c` is too small for min_grid steps."""
    assert c % 8 == 0, "channel count must be a multiple of 8 for the tiled kernel"
    divisors = [t for t in range(8, c + 1, 8) if c % t == 0]
    fitting = [t for t in divisors if n * t * hw_padded * itemsize <= max_block_bytes]
    if not fitting:
        fitting = [8]  # smallest legal tile; block may exceed the soft cap for huge N*HW
    long_grid = [t for t in fitting if (c // t) >= min_grid]
    return max(long_grid) if long_grid else max(fitting)


def fused_bn_add_relu_kernel(x_ref, y_ref, g_ref, b_ref, o_ref, *, inv_count, eps):
    # x_ref / y_ref / o_ref: (N, c_tile, HW) ; g_ref / b_ref: (c_tile, 1).
    x = x_ref[...].astype(jnp.float32)

    # Per-channel batch statistics over (N, HW), two-pass form (no E[x^2]-mean^2
    # cancellation).  Lane-axis reduce (XLU) + add across the small batch axis.
    mean = jnp.sum(jnp.sum(x, axis=2, keepdims=True), axis=0, keepdims=True) * inv_count
    d = x - mean                                                         # (N, c_tile, HW)
    var = jnp.sum(jnp.sum(d * d, axis=2, keepdims=True), axis=0, keepdims=True) * inv_count
    inv_std = jax.lax.rsqrt(var + eps)                                   # (1, c_tile, 1)

    g = g_ref[...].astype(jnp.float32)[None]                             # (1, c_tile, 1)
    b = b_ref[...].astype(jnp.float32)[None]
    scale = g * inv_std

    y = y_ref[...].astype(jnp.float32)
    out = d * scale + b + y                                              # FMA + add
    o_ref[...] = jnp.maximum(out, 0.0).astype(o_ref.dtype)               # ReLU


def batchnorm_add_relu(x457, x450, gamma, beta, eps=EPS):
    """Fused training-mode BatchNorm2d(x457) + x450 + ReLU.  NCHW in, NCHW out."""
    n, c, h, w = x457.shape
    hw = h * w
    x3d = x457.reshape(n, c, hw)            # free reshape, no HBM transpose
    y3d = x450.reshape(n, c, hw)
    g2d = gamma.reshape(c, 1).astype(jnp.float32)
    b2d = beta.reshape(c, 1).astype(jnp.float32)

    # VMEM budget with the real lane padding (HW -> next multiple of 128) and f32
    # accounting (covers the in-kernel f32 upcast even for bf16 inputs).
    hw_padded = _round_up(hw, 128)
    c_tile = _pick_c_tile(c, n, hw_padded, itemsize=4)
    ncb = c // c_tile

    slab_map = lambda cb: (0, cb, 0)        # full batch, channel-block cb, full spatial
    vec_map = lambda cb: (cb, 0)            # per-channel (C, 1) parameter vectors

    out3d = pl.pallas_call(
        functools.partial(fused_bn_add_relu_kernel,
                          inv_count=1.0 / float(n * hw), eps=float(eps)),
        out_shape=jax.ShapeDtypeStruct((n, c, hw), x457.dtype),
        grid_spec=pltpu.PrefetchScalarGridSpec(
            num_scalar_prefetch=0,
            grid=(ncb,),
            in_specs=[
                pl.BlockSpec((n, c_tile, hw), slab_map),
                pl.BlockSpec((n, c_tile, hw), slab_map),
                pl.BlockSpec((c_tile, 1), vec_map),
                pl.BlockSpec((c_tile, 1), vec_map),
            ],
            out_specs=pl.BlockSpec((n, c_tile, hw), slab_map),
        ),
        compiler_params=pltpu.CompilerParams(
            dimension_semantics=("parallel",)),   # >= 8 blocks -> both v7x TCs busy
    )(x3d, y3d, g2d, b2d)

    # TODO(synk): nn.BatchNorm2d also updates running_mean/running_var in training
    # mode; that state side-effect is not reproduced (forward output is unaffected).
    return out3d.reshape(n, c, h, w)


def reference(x457, x450, gamma, beta, eps=EPS):
    xf = x457.astype(jnp.float32)
    mean = jnp.mean(xf, axis=(0, 2, 3), keepdims=True)
    var = jnp.mean((xf - mean) ** 2, axis=(0, 2, 3), keepdims=True)
    xhat = (xf - mean) * jax.lax.rsqrt(var + eps)
    out = xhat * gamma.reshape(1, -1, 1, 1) + beta.reshape(1, -1, 1, 1)
    return jnp.maximum(out + x450.astype(jnp.float32), 0.0).astype(x457.dtype)


if __name__ == "__main__":
    # Small shapes consistent with the module's NCHW forward (orig: 1x1024x14x14).
    N, C, H, W = 2, 256, 14, 14

    key = jax.random.PRNGKey(0)
    k1, k2, k3, k4 = jax.random.split(key, 4)
    x457 = jax.random.normal(k1, (N, C, H, W), dtype=jnp.float32)
    x450 = jax.random.normal(k2, (N, C, H, W), dtype=jnp.float32)
    # Affine BN parameters (default init is weight=1, bias=0; perturb to exercise them).
    gamma = 1.0 + 0.1 * jax.random.normal(k3, (C,), dtype=jnp.float32)
    beta = 0.1 * jax.random.normal(k4, (C,), dtype=jnp.float32)

    out = batchnorm_add_relu(x457, x450, gamma, beta)
    out = jax.block_until_ready(out)

    ref = reference(x457, x450, gamma, beta)
    assert out.shape == (N, C, H, W)
    assert jnp.allclose(out, ref, atol=2e-4, rtol=2e-4), float(jnp.max(jnp.abs(out - ref)))

    print("KERNEL_OK")
</pallas_src>

<mosaic_0001>
module attributes {stable_mosaic.version = 11 : i64} {
  func.func @fused_bn_add_relu_kernel(%arg0: i32, %arg1: memref<2x32x196xf32, #tpu.memory_space<vmem>>, %arg2: memref<2x32x196xf32, #tpu.memory_space<vmem>>, %arg3: memref<32x1xf32, #tpu.memory_space<vmem>>, %arg4: memref<32x1xf32, #tpu.memory_space<vmem>>, %arg5: memref<2x32x196xf32, #tpu.memory_space<vmem>>) attributes {dimension_semantics = [#tpu.dimension_semantics<parallel>], iteration_bounds = array<i64: 8>, scalar_prefetch = 0 : i64, scratch_operands = 0 : i64, tpu.core_type = #tpu.core_type<tc>, window_params = [{transform_indices = @transform_0, window_bounds = array<i64: 2, 32, 196>}, {transform_indices = @transform_1, window_bounds = array<i64: 2, 32, 196>}, {transform_indices = @transform_2, window_bounds = array<i64: 32, 1>}, {transform_indices = @transform_3, window_bounds = array<i64: 32, 1>}, {transform_indices = @transform_4, window_bounds = array<i64: 2, 32, 196>}]} {
    %c0 = arith.constant 0 : index
    %c0_0 = arith.constant 0 : index
    %c0_1 = arith.constant 0 : index
    %0 = vector.load %arg1[%c0, %c0_0, %c0_1] : memref<2x32x196xf32, #tpu.memory_space<vmem>>, vector<2x32x196xf32>
    %cst = arith.constant dense<0.000000e+00> : vector<2x32xf32>
    %1 = vector.multi_reduction <add>, %0, %cst [2] : vector<2x32x196xf32> to vector<2x32xf32>
    %2 = vector.shape_cast %1 : vector<2x32xf32> to vector<2x32x1xf32>
    %cst_2 = arith.constant dense<0.000000e+00> : vector<32x1xf32>
    %3 = vector.multi_reduction <add>, %2, %cst_2 [0] : vector<2x32x1xf32> to vector<32x1xf32>
    %4 = vector.shape_cast %3 : vector<32x1xf32> to vector<1x32x1xf32>
    %cst_3 = arith.constant 0.00255102036 : f32
    %5 = vector.broadcast %cst_3 : f32 to vector<1x32x1xf32>
    %6 = arith.mulf %4, %5 : vector<1x32x1xf32>
    %7 = vector.broadcast %6 : vector<1x32x1xf32> to vector<2x32x196xf32>
    %8 = arith.subf %0, %7 : vector<2x32x196xf32>
    %9 = arith.mulf %8, %8 : vector<2x32x196xf32>
    %cst_4 = arith.constant dense<0.000000e+00> : vector<2x32xf32>
    %10 = vector.multi_reduction <add>, %9, %cst_4 [2] : vector<2x32x196xf32> to vector<2x32xf32>
    %11 = vector.shape_cast %10 : vector<2x32xf32> to vector<2x32x1xf32>
    %cst_5 = arith.constant dense<0.000000e+00> : vector<32x1xf32>
    %12 = vector.multi_reduction <add>, %11, %cst_5 [0] : vector<2x32x1xf32> to vector<32x1xf32>
    %13 = vector.shape_cast %12 : vector<32x1xf32> to vector<1x32x1xf32>
    %cst_6 = arith.constant 0.00255102036 : f32
    %14 = vector.broadcast %cst_6 : f32 to vector<1x32x1xf32>
    %15 = arith.mulf %13, %14 : vector<1x32x1xf32>
    %cst_7 = arith.constant 9.99999974E-6 : f32
    %16 = vector.broadcast %cst_7 : f32 to vector<1x32x1xf32>
    %17 = arith.addf %15, %16 : vector<1x32x1xf32>
    %18 = math.rsqrt %17 : vector<1x32x1xf32>
    %c0_8 = arith.constant 0 : index
    %c0_9 = arith.constant 0 : index
    %19 = vector.load %arg3[%c0_8, %c0_9] : memref<32x1xf32, #tpu.memory_space<vmem>>, vector<32x1xf32>
    %20 = vector.shape_cast %19 : vector<32x1xf32> to vector<1x32x1xf32>
    %c0_10 = arith.constant 0 : index
    %c0_11 = arith.constant 0 : index
    %21 = vector.load %arg4[%c0_10, %c0_11] : memref<32x1xf32, #tpu.memory_space<vmem>>, vector<32x1xf32>
    %22 = vector.shape_cast %21 : vector<32x1xf32> to vector<1x32x1xf32>
    %23 = arith.mulf %20, %18 : vector<1x32x1xf32>
    %c0_12 = arith.constant 0 : index
    %c0_13 = arith.constant 0 : index
    %c0_14 = arith.constant 0 : index
    %24 = vector.load %arg2[%c0_12, %c0_13, %c0_14] : memref<2x32x196xf32, #tpu.memory_space<vmem>>, vector<2x32x196xf32>
    %25 = vector.broadcast %23 : vector<1x32x1xf32> to vector<2x32x196xf32>
    %26 = arith.mulf %8, %25 : vector<2x32x196xf32>
    %27 = vector.broadcast %22 : vector<1x32x1xf32> to vector<2x32x196xf32>
    %28 = arith.addf %26, %27 : vector<2x32x196xf32>
    %29 = arith.addf %28, %24 : vector<2x32x196xf32>
    %cst_15 = arith.constant 0.000000e+00 : f32
    %30 = vector.broadcast %cst_15 : f32 to vector<2x32x196xf32>
    %31 = arith.maximumf %29, %30 : vector<2x32x196xf32>
    %c0_16 = arith.constant 0 : index
    %c0_17 = arith.constant 0 : index
    %c0_18 = arith.constant 0 : index
    %32 = vector.load %arg5[%c0_16, %c0_17, %c0_18] : memref<2x32x196xf32, #tpu.memory_space<vmem>>, vector<2x32x196xf32>
    tpu.vector_store %arg5[%c0_16, %c0_17, %c0_18], %31 {strides = array<i32>} : memref<2x32x196xf32, #tpu.memory_space<vmem>>, vector<2x32x196xf32>,
    return
  }
  func.func @transform_0(%arg0: i32) -> (i32, i32, i32) {
    %c0_i32 = arith.constant 0 : i32
    %c0_i32_0 = arith.constant 0 : i32
    %c0_i32_1 = arith.constant 0 : i32
    return %c0_i32, %arg0, %c0_i32_0 : i32, i32, i32
  }
  func.func @transform_1(%arg0: i32) -> (i32, i32, i32) {
    %c0_i32 = arith.constant 0 : i32
    %c0_i32_0 = arith.constant 0 : i32
    %c0_i32_1 = arith.constant 0 : i32
    return %c0_i32, %arg0, %c0_i32_0 : i32, i32, i32
  }
  func.func @transform_2(%arg0: i32) -> (i32, i32) {
    %c0_i32 = arith.constant 0 : i32
    %c0_i32_0 = arith.constant 0 : i32
    return %arg0, %c0_i32 : i32, i32
  }
  func.func @transform_3(%arg0: i32) -> (i32, i32) {
    %c0_i32 = arith.constant 0 : i32
    %c0_i32_0 = arith.constant 0 : i32
    return %arg0, %c0_i32 : i32, i32
  }
  func.func @transform_4(%arg0: i32) -> (i32, i32, i32) {
    %c0_i32 = arith.constant 0 : i32
    %c0_i32_0 = arith.constant 0 : i32
    %c0_i32_1 = arith.constant 0 : i32
    return %c0_i32, %arg0, %c0_i32_0 : i32, i32, i32
  }
}

</mosaic_0001>

<llo_original>
// kernel: tpu_custom_call.1
$region0: #{tpu_custom_call.1}
  #allocation0 [shape = 'u32[]', space=smem, size = 0x4, offset = 0x4, fixed_abs, tag = 'smem constant byte address 0x4 - core index']
  #allocation1 [shape = 'u32[144,128]{1,0:T(1,128)}', space=vmem, size = 0x12000, scoped, tag = 'internal scratch']
  %s0 = inlined_call_operand.vmem [shape: f32[2,256,196], index: 0, kind: input, shape index: {}]
  %s1 = inlined_call_operand.vmem [shape: f32[2,256,196], index: 1, kind: input, shape index: {}]
  %s2 = inlined_call_operand.vmem [shape: f32[256,1], index: 2, kind: input, shape index: {}]
  %s3 = inlined_call_operand.vmem [shape: f32[256,1], index: 3, kind: input, shape index: {}]
  %s4 = inlined_call_operand.vmem [shape: f32[2,256,196], index: 4, kind: output, shape index: {}]
  %s5 = sld [smem:[#allocation0]]
  $region114: #{tpu_custom_call.1} parent=0
    _
  %s7 = ssub.s32 1, %s5
  %s8 = scalar_select 0, %s7, %s5
  $region1: #{tpu_custom_call.1} parent=0
    #allocation2 [shape = 'u8[131072]{0}', space=vmem, size = 0x20000, scoped, tag = 'input window, operand 0']
    #allocation3 [shape = 'u8[131072]{0}', space=vmem, size = 0x20000, scoped, tag = 'input window, operand 1']
    #allocation4 [shape = 'u8[131072]{0}', space=vmem, size = 0x20000, scoped, tag = 'output window, operand 0']
    loop: start=0, step=1, limit=10
    $region2: #{tpu_custom_call.1} parent=1 // loop_pre_header
      _
    $region3: #{tpu_custom_call.1} parent=1 // loop_header
      %s10 = sphi 0, %s14
      %p11 = scmp.ge.s32.totalorder %s10, 10
      %s20 = sphi 0, %s22
      %s23 = sphi 0, %s20
      %s24 = sphi 0, %s23
      %s40 = sphi 0, %s24
      %s46 = sphi 0, %s48
      %s49 = sphi 0, %s46
      %s50 = sphi 0, %s49
      %s66 = sphi 0, %s50
      %s72 = sphi 0, %s74
      %s75 = sphi 0, %s72
      %s76 = sphi 0, %s75
      %s92 = sphi 0, %s76
      %s98 = sphi 0, %s100
      %s101 = sphi 0, %s98
      %s102 = sphi 0, %s101
      %s118 = sphi 0, %s102
      %s124 = sphi 0, %s126
      %s127 = sphi 0, %s124
      %s128 = sphi 0, %s127
      %s144 = sphi 0, %s128
    $region4: #{tpu_custom_call.1} parent=1 // loop_header_branch
      %13 = sbr.rel (%p11) target = $region8
    $region5: #{tpu_custom_call.1} parent=1 // loop_body
      %s15 = ssub.s32 %s10, 1
      %s16 = ssub.s32 %s10, 2
      %s17 = sadd.s32 %s10, 1
      %s18 = ssub.s32 %s10, %s17
      %p19 = scmp.eq.s32.totalorder %s18, 0
      %s21 = sadd.s32 %s20, 1
      %s22 = scalar_select %p19, %s20, %s21
      %p25 = pneg %p19
      %p26 = scmp.eq.s32.totalorder %s10, 7
      %p27 = por %p25, %p26
      %p28 = scmp.ne.s32.totalorder %s20, %s23
      %p29 = scmp.eq.s32.totalorder %s10, 0
      %p30 = por %p28, %p29
      %p31 = scmp.ne.s32.totalorder %s20, %s23
      %p32 = scmp.eq.s32.totalorder %s15, 7
      %p33 = por %p31, %p32
      %p34 = scmp.ne.s32.totalorder %s23, %s24
      %p35 = scmp.eq.s32.totalorder %s15, 0
      %p36 = por %p34, %p35
      %p37 = scmp.ne.s32.totalorder %s23, %s24
      %p38 = scmp.eq.s32.totalorder %s16, 7
      %p39 = por %p37, %p38
      %p41 = scmp.ne.s32.totalorder %s24, %s40
      %p42 = scmp.eq.s32.totalorder %s16, 0
      %p43 = por %p41, %p42
      %s44 = ssub.s32 %s10, %s17
      %p45 = scmp.eq.s32.totalorder %s44, 0
      %s47 = sadd.s32 %s46, 1
      %s48 = scalar_select %p45, %s46, %s47
      %p51 = pneg %p45
      %p52 = scmp.eq.s32.totalorder %s10, 7
      %p53 = por %p51, %p52
      %p54 = scmp.ne.s32.totalorder %s46, %s49
      %p55 = scmp.eq.s32.totalorder %s10, 0
      %p56 = por %p54, %p55
      %p57 = scmp.ne.s32.totalorder %s46, %s49
      %p58 = scmp.eq.s32.totalorder %s15, 7
      %p59 = por %p57, %p58
      %p60 = scmp.ne.s32.totalorder %s49, %s50
      %p61 = scmp.eq.s32.totalorder %s15, 0
      %p62 = por %p60, %p61
      %p63 = scmp.ne.s32.totalorder %s49, %s50
      %p64 = scmp.eq.s32.totalorder %s16, 7
      %p65 = por %p63, %p64
      %p67 = scmp.ne.s32.totalorder %s50, %s66
      %p68 = scmp.eq.s32.totalorder %s16, 0
      %p69 = por %p67, %p68
      %s70 = ssub.s32 %s10, %s17
      %p71 = scmp.eq.s32.totalorder %s70, 0
      %s73 = sadd.s32 %s72, 1
      %s74 = scalar_select %p71, %s72, %s73
      %p77 = pneg %p71
      %p78 = scmp.eq.s32.totalorder %s10, 7
      %p79 = por %p77, %p78
      %p80 = scmp.ne.s32.totalorder %s72, %s75
      %p81 = scmp.eq.s32.totalorder %s10, 0
      %p82 = por %p80, %p81
      %p83 = scmp.ne.s32.totalorder %s72, %s75
      %p84 = scmp.eq.s32.totalorder %s15, 7
      %p85 = por %p83, %p84
      %p86 = scmp.ne.s32.totalorder %s75, %s76
      %p87 = scmp.eq.s32.totalorder %s15, 0
      %p88 = por %p86, %p87
      %p89 = scmp.ne.s32.totalorder %s75, %s76
      %p90 = scmp.eq.s32.totalorder %s16, 7
      %p91 = por %p89, %p90
      %p93 = scmp.ne.s32.totalorder %s76, %s92
      %p94 = scmp.eq.s32.totalorder %s16, 0
      %p95 = por %p93, %p94
      %s96 = ssub.s32 %s10, %s17
      %p97 = scmp.eq.s32.totalorder %s96, 0
      %s99 = sadd.s32 %s98, 1
      %s100 = scalar_select %p97, %s98, %s99
      %p103 = pneg %p97
      %p104 = scmp.eq.s32.totalorder %s10, 7
      %p105 = por %p103, %p104
      %p106 = scmp.ne.s32.totalorder %s98, %s101
      %p107 = scmp.eq.s32.totalorder %s10, 0
      %p108 = por %p106, %p107
      %p109 = scmp.ne.s32.totalorder %s98, %s101
      %p110 = scmp.eq.s32.totalorder %s15, 7
      %p111 = por %p109, %p110
      %p112 = scmp.ne.s32.totalorder %s101, %s102
      %p113 = scmp.eq.s32.totalorder %s15, 0
      %p114 = por %p112, %p113
      %p115 = scmp.ne.s32.totalorder %s101, %s102
      %p116 = scmp.eq.s32.totalorder %s16, 7
      %p117 = por %p115, %p116
      %p119 = scmp.ne.s32.totalorder %s102, %s118
      %p120 = scmp.eq.s32.totalorder %s16, 0
      %p121 = por %p119, %p120
      %s122 = ssub.s32 %s10, %s17
      %p123 = scmp.eq.s32.totalorder %s122, 0
      %s125 = sadd.s32 %s124, 1
      %s126 = scalar_select %p123, %s124, %s125
      %p129 = pneg %p123
      %p130 = scmp.eq.s32.totalorder %s10, 7
      %p131 = por %p129, %p130
      %p132 = scmp.ne.s32.totalorder %s124, %s127
      %p133 = scmp.eq.s32.totalorder %s10, 0
      %p134 = por %p132, %p133
      %p135 = scmp.ne.s32.totalorder %s124, %s127
      %p136 = scmp.eq.s32.totalorder %s15, 7
      %p137 = por %p135, %p136
      %p138 = scmp.ne.s32.totalorder %s127, %s128
      %p139 = scmp.eq.s32.totalorder %s15, 0
      %p140 = por %p138, %p139
      %p141 = scmp.ne.s32.totalorder %s127, %s128
      %p142 = scmp.eq.s32.totalorder %s16, 7
      %p143 = por %p141, %p142
      %p145 = scmp.ne.s32.totalorder %s128, %s144
      %p146 = scmp.eq.s32.totalorder %s16, 0
      %p147 = por %p145, %p146
      %p148 = scmp.le.s32.totalorder 1, %s10
      %p149 = scmp.lt.s32.totalorder %s10, 9
      %p150 = pnand %p148, %p149
      %p151 = pneg %p150
      // Predicated region
      $region9: #{tpu_custom_call.1} parent=5 // pred_check
        _
      $region10: #{tpu_custom_call.1} parent=5 // pred_check_branch
        %153 = sbr.rel (%p150) target = $region12
      $region11: #{tpu_custom_call.1} parent=5 // pred_region
        %s154 = ssub.s32 %s10, 1
      $region12: #{tpu_custom_call.1} parent=5 // pred_fallthru
        _
      %p155 = scmp.lt.s32.totalorder %s10, 8
      // Predicated region
      $region13: #{tpu_custom_call.1} parent=5 // pred_check
        %p156 = pneg %p155
      $region14: #{tpu_custom_call.1} parent=5 // pred_check_branch
        %158 = sbr.rel (%p156) target = $region16
      $region15: #{tpu_custom_call.1} parent=5 // pred_region
        // Predicated region
        $region17: #{tpu_custom_call.1} parent=15 // pred_check
          %p159 = pneg %p30
        $region18: #{tpu_custom_call.1} parent=15 // pred_check_branch
          %161 = sbr.rel (%p159) target = $region20
        $region19: #{tpu_custom_call.1} parent=15 // pred_region
          %s162 = sand.u32 %s20, 1
          %s163 = sand.u32 %s20, 1
          %s164 = smul.addr %s163, 128
          %s165 = scalar_lea.vmem [#allocation2], %s164
          %s166 = smul.u32 4, %s10
          %s167 = smul.addr %s166, 2
          %s168 = smul.addr %s167, 8
          %s169 = scalar_lea.vmem %s0, %s168
          // Predicated region
          $region21: #{tpu_custom_call.1} parent=19 // pred_check
            _
          $region22: #{tpu_custom_call.1} parent=19 // pred_check_branch
            %171 = sbr.rel (0) target = $region24
          $region23: #{tpu_custom_call.1} parent=19 // pred_region
            // Predicated region
            $region25: #{tpu_custom_call.1} parent=23 // pred_check
              _
            $region26: #{tpu_custom_call.1} parent=23 // pred_check_branch
              %173 = sbr.rel (0) target = $region28
            $region27: #{tpu_custom_call.1} parent=23 // pred_region
              loop: start=0, step=1, limit=1
              $region29: #{tpu_custom_call.1} parent=27 // loop_pre_header
                _
              $region30: #{tpu_custom_call.1} parent=27 // loop_header
                %s175 = sphi 0, %s179
                %p176 = scmp.ge.s32.totalorder %s175, 1
                %s180 = sphi %s169, %s169
                %s181 = sphi %s165, %s165
              $region31: #{tpu_custom_call.1} parent=27 // loop_header_branch
                %178 = sbr.rel (%p176) target = $region35
              $region32: #{tpu_custom_call.1} parent=27 // loop_body
                %v182 = vld [vmem:[%s180] sm:$0xff]
                %183 = vst [vmem:[%s181] sm:$0xff] %v182
                %v184 = vld [vmem:[%s180 + $0x8] sm:$0xff]
                %185 = vst [vmem:[%s181 + $0x8] sm:$0xff] %v184
                %v186 = vld [vmem:[%s180 + $0x10] sm:$0xff]
                %187 = vst [vmem:[%s181 + $0x10] sm:$0xff] %v186
                %v188 = vld [vmem:[%s180 + $0x18] sm:$0xff]
                %189 = vst [vmem:[%s181 + $0x18] sm:$0xff] %v188
                %v190 = vld [vmem:[%s180 + $0x20] sm:$0xff]
                %191 = vst [vmem:[%s181 + $0x20] sm:$0xff] %v190
                %v192 = vld [vmem:[%s180 + $0x28] sm:$0xff]
                %193 = vst [vmem:[%s181 + $0x28] sm:$0xff] %v192
                %v194 = vld [vmem:[%s180 + $0x30] sm:$0xff]
                %195 = vst [vmem:[%s181 + $0x30] sm:$0xff] %v194
                %v196 = vld [vmem:[%s180 + $0x38] sm:$0xff]
                %197 = vst [vmem:[%s181 + $0x38] sm:$0xff] %v196
                %v198 = vld [vmem:[%s180 + $0x200] sm:$0xff]
                %199 = vst [vmem:[%s181 + $0x40] sm:$0xff] %v198
                %v200 = vld [vmem:[%s180 + $0x208] sm:$0xff]
                %201 = vst [vmem:[%s181 + $0x48] sm:$0xff] %v200
                %v202 = vld [vmem:[%s180 + $0x210] sm:$0xff]
                %203 = vst [vmem:[%s181 + $0x50] sm:$0xff] %v202
                %v204 = vld [vmem:[%s180 + $0x218] sm:$0xff]
                %205 = vst [vmem:[%s181 + $0x58] sm:$0xff] %v204
                %v206 = vld [vmem:[%s180 + $0x220] sm:$0xff]
                %207 = vst [vmem:[%s181 + $0x60] sm:$0xff] %v206
                %v208 = vld [vmem:[%s180 + $0x228] sm:$0xff]
                %209 = vst [vmem:[%s181 + $0x68] sm:$0xff] %v208
                %v210 = vld [vmem:[%s180 + $0x230] sm:$0xff]
                %211 = vst [vmem:[%s181 + $0x70] sm:$0xff] %v210
                %v212 = vld [vmem:[%s180 + $0x238] sm:$0xff]
                %213 = vst [vmem:[%s181 + $0x78] sm:$0xff] %v212
              $region33: #{tpu_custom_call.1} parent=27 // loop_footer
                %s179 = sadd.s32 1, %s175
              $region34: #{tpu_custom_call.1} parent=27 // loop_footer_branch
                %174 = sbr.rel target = $region30
              $region35: #{tpu_custom_call.1} parent=27 // loop_exit
                _
            $region28: #{tpu_custom_call.1} parent=23 // pred_fallthru
              _
            // Predicated region
            $region36: #{tpu_custom_call.1} parent=23 // pred_check
              _
            $region37: #{tpu_custom_call.1} parent=23 // pred_check_branch
              %215 = sbr.rel target = $region39
            $region38: #{tpu_custom_call.1} parent=23 // pred_region
              _
            $region39: #{tpu_custom_call.1} parent=23 // pred_fallthru
              _
          $region24: #{tpu_custom_call.1} parent=19 // pred_fallthru
            _
          %216 = vnop
        $region20: #{tpu_custom_call.1} parent=15 // pred_fallthru
          _
        // Predicated region
        $region40: #{tpu_custom_call.1} parent=15 // pred_check
          %p217 = pneg %p56
        $region41: #{tpu_custom_call.1} parent=15 // pred_check_branch
          %219 = sbr.rel (%p217) target = $region43
        $region42: #{tpu_custom_call.1} parent=15 // pred_region
          %s220 = sand.u32 %s46, 1
          %s221 = sand.u32 %s46, 1
          %s222 = smul.addr %s221, 128
          %s223 = scalar_lea.vmem [#allocation3], %s222
          %s224 = smul.u32 4, %s10
          %s225 = smul.addr %s224, 2
          %s226 = smul.addr %s225, 8
          %s227 = scalar_lea.vmem %s1, %s226
          // Predicated region
          $region44: #{tpu_custom_call.1} parent=42 // pred_check
            _
          $region45: #{tpu_custom_call.1} parent=42 // pred_check_branch
            %229 = sbr.rel (0) target = $region47
          $region46: #{tpu_custom_call.1} parent=42 // pred_region
            // Predicated region
            $region48: #{tpu_custom_call.1} parent=46 // pred_check
              _
            $region49: #{tpu_custom_call.1} parent=46 // pred_check_branch
              %231 = sbr.rel (0) target = $region51
            $region50: #{tpu_custom_call.1} parent=46 // pred_region
              loop: start=0, step=1, limit=1
              $region52: #{tpu_custom_call.1} parent=50 // loop_pre_header
                _
              $region53: #{tpu_custom_call.1} parent=50 // loop_header
                %s233 = sphi 0, %s237
                %p234 = scmp.ge.s32.totalorder %s233, 1
                %s238 = sphi %s227, %s227
                %s239 = sphi %s223, %s223
              $region54: #{tpu_custom_call.1} parent=50 // loop_header_branch
                %236 = sbr.rel (%p234) target = $region58
              $region55: #{tpu_custom_call.1} parent=50 // loop_body
                %v240 = vld [vmem:[%s238] sm:$0xff]
                %241 = vst [vmem:[%s239] sm:$0xff] %v240
                %v242 = vld [vmem:[%s238 + $0x8] sm:$0xff]
                %243 = vst [vmem:[%s239 + $0x8] sm:$0xff] %v242
                %v244 = vld [vmem:[%s238 + $0x10] sm:$0xff]
                %245 = vst [vmem:[%s239 + $0x10] sm:$0xff] %v244
                %v246 = vld [vmem:[%s238 + $0x18] sm:$0xff]
                %247 = vst [vmem:[%s239 + $0x18] sm:$0xff] %v246
                %v248 = vld [vmem:[%s238 + $0x20] sm:$0xff]
                %249 = vst [vmem:[%s239 + $0x20] sm:$0xff] %v248
                %v250 = vld [vmem:[%s238 + $0x28] sm:$0xff]
                %251 = vst [vmem:[%s239 + $0x28] sm:$0xff] %v250
                %v252 = vld [vmem:[%s238 + $0x30] sm:$0xff]
                %253 = vst [vmem:[%s239 + $0x30] sm:$0xff] %v252
                %v254 = vld [vmem:[%s238 + $0x38] sm:$0xff]
                %255 = vst [vmem:[%s239 + $0x38] sm:$0xff] %v254
                %v256 = vld [vmem:[%s238 + $0x200] sm:$0xff]
                %257 = vst [vmem:[%s239 + $0x40] sm:$0xff] %v256
                %v258 = vld [vmem:[%s238 + $0x208] sm:$0xff]
                %259 = vst [vmem:[%s239 + $0x48] sm:$0xff] %v258
                %v260 = vld [vmem:[%s238 + $0x210] sm:$0xff]
                %261 = vst [vmem:[%s239 + $0x50] sm:$0xff] %v260
                %v262 = vld [vmem:[%s238 + $0x218] sm:$0xff]
                %263 = vst [vmem:[%s239 + $0x58] sm:$0xff] %v262
                %v264 = vld [vmem:[%s238 + $0x220] sm:$0xff]
                %265 = vst [vmem:[%s239 + $0x60] sm:$0xff] %v264
                %v266 = vld [vmem:[%s238 + $0x228] sm:$0xff]
                %267 = vst [vmem:[%s239 + $0x68] sm:$0xff] %v266
                %v268 = vld [vmem:[%s238 + $0x230] sm:$0xff]
                %269 = vst [vmem:[%s239 + $0x70] sm:$0xff] %v268
                %v270 = vld [vmem:[%s238 + $0x238] sm:$0xff]
                %271 = vst [vmem:[%s239 + $0x78] sm:$0xff] %v270
              $region56: #{tpu_custom_call.1} parent=50 // loop_footer
                %s237 = sadd.s32 1, %s233
              $region57: #{tpu_custom_call.1} parent=50 // loop_footer_branch
                %232 = sbr.rel target = $region53
              $region58: #{tpu_custom_call.1} parent=50 // loop_exit
                _
            $region51: #{tpu_custom_call.1} parent=46 // pred_fallthru
              _
            // Predicated region
            $region59: #{tpu_custom_call.1} parent=46 // pred_check
              _
            $region60: #{tpu_custom_call.1} parent=46 // pred_check_branch
              %273 = sbr.rel target = $region62
            $region61: #{tpu_custom_call.1} parent=46 // pred_region
              _
            $region62: #{tpu_custom_call.1} parent=46 // pred_fallthru
              _
          $region47: #{tpu_custom_call.1} parent=42 // pred_fallthru
            _
          %274 = vnop
        $region43: #{tpu_custom_call.1} parent=15 // pred_fallthru
          _
        // Predicated region
        $region63: #{tpu_custom_call.1} parent=15 // pred_check
          %p275 = pneg %p82
        $region64: #{tpu_custom_call.1} parent=15 // pred_check_branch
          %277 = sbr.rel (%p275) target = $region66
        $region65: #{tpu_custom_call.1} parent=15 // pred_region
          %s278 = smul.u32 4, %s10
          %p279 = scmp.lt.s32.totalorder %s278, 31
          %s280 = scalar_select %p279, %s278, 31
          %s281 = smul.addr %s280, 8
          %s282 = scalar_lea.vmem %s2, %s281
          %s283 = smul.u32 4, %s10
        $region66: #{tpu_custom_call.1} parent=15 // pred_fallthru
          _
        // Predicated region
        $region67: #{tpu_custom_call.1} parent=15 // pred_check
          %p284 = pneg %p108
        $region68: #{tpu_custom_call.1} parent=15 // pred_check_branch
          %286 = sbr.rel (%p284) target = $region70
        $region69: #{tpu_custom_call.1} parent=15 // pred_region
          %s287 = smul.u32 4, %s10
          %p288 = scmp.lt.s32.totalorder %s287, 31
          %s289 = scalar_select %p288, %s287, 31
          %s290 = smul.addr %s289, 8
          %s291 = scalar_lea.vmem %s3, %s290
          %s292 = smul.u32 4, %s10
        $region70: #{tpu_custom_call.1} parent=15 // pred_fallthru
          _
      $region16: #{tpu_custom_call.1} parent=5 // pred_fallthru
        _
      %p293 = scmp.le.s32.totalorder 1, %s10
      %p294 = scmp.lt.s32.totalorder %s10, 9
      %p295 = pnand %p293, %p294
      %p296 = pneg %p295
      // Predicated region
      $region71: #{tpu_custom_call.1} parent=5 // pred_check
        _
      $region72: #{tpu_custom_call.1} parent=5 // pred_check_branch
        %298 = sbr.rel (%p295) target = $region74
      $region73: #{tpu_custom_call.1} parent=5 // pred_region
        %s299 = ssub.s32 %s10, 1
        %s300 = sand.u32 %s23, 1
        %s301 = sand.u32 %s23, 1
        %s302 = smul.addr %s301, 128
        %s303 = scalar_lea.vmem [#allocation2], %s302
        // Predicated region
        $region75: #{tpu_custom_call.1} parent=73 // pred_check
          %p304 = pneg %p36
        $region76: #{tpu_custom_call.1} parent=73 // pred_check_branch
          %306 = sbr.rel (%p304) target = $region78
        $region77: #{tpu_custom_call.1} parent=73 // pred_region
          _
        $region78: #{tpu_custom_call.1} parent=73 // pred_fallthru
          _
        %s307 = sand.u32 %s49, 1
        %s308 = sand.u32 %s49, 1
        %s309 = smul.addr %s308, 128
        %s310 = scalar_lea.vmem [#allocation3], %s309
        // Predicated region
        $region79: #{tpu_custom_call.1} parent=73 // pred_check
          %p311 = pneg %p62
        $region80: #{tpu_custom_call.1} parent=73 // pred_check_branch
          %313 = sbr.rel (%p311) target = $region82
        $region81: #{tpu_custom_call.1} parent=73 // pred_region
          _
        $region82: #{tpu_custom_call.1} parent=73 // pred_fallthru
          _
        %s314 = sand.u32 %s23, 1
        %s315 = sand.u32 %s23, 1
        %s316 = smul.addr %s315, 128
        %s317 = scalar_lea.vmem [#allocation2], %s316
        %p318 = pneg %p36
        %p319 = pneg %p33
        %s320 = sand.u32 %s49, 1
        %s321 = sand.u32 %s49, 1
        %s322 = smul.addr %s321, 128
        %s323 = scalar_lea.vmem [#allocation3], %s322
        %p324 = pneg %p62
        %p325 = pneg %p59
        %s326 = smul.u32 4, %s15
        %p327 = scmp.lt.s32.totalorder %s326, 31
        %s328 = scalar_select %p327, %s326, 31
        %s329 = smul.addr %s328, 8
        %s330 = scalar_lea.vmem %s2, %s329
        %p331 = pneg %p88
        %p332 = pneg %p85
        %s333 = smul.u32 4, %s15
        %p334 = scmp.lt.s32.totalorder %s333, 31
        %s335 = scalar_select %p334, %s333, 31
        %s336 = smul.addr %s335, 8
        %s337 = scalar_lea.vmem %s3, %s336
        %p338 = pneg %p114
        %p339 = pneg %p111
        %p340 = pneg %p140
        %p341 = pneg %p137
        %s342 = sand.u32 %s127, 1
        %s343 = sand.u32 %s127, 1
        %s344 = smul.addr %s343, 128
        %s345 = scalar_lea.vmem [#allocation4], %s344
        %s346 = smul.u32 4, %s15
        %s347 = smul.u32 4, %s15
        %s348 = smul.u32 4, %s15
        %p349 = scmp.lt.s32.totalorder %s348, 31
        %s350 = scalar_select %p349, %s348, 31
        %s351 = smul.addr %s350, 8
        %s352 = scalar_lea.vmem %s2, %s351
        %s353 = smul.u32 4, %s15
        %s354 = smul.u32 4, %s15
        %p355 = scmp.lt.s32.totalorder %s354, 31
        %s356 = scalar_select %p355, %s354, 31
        %s357 = smul.addr %s356, 8
        %s358 = scalar_lea.vmem %s3, %s357
        %s359 = smul.u32 4, %s15
        %s360 = smul.u32 4, %s15
        %v361 = vld [vmem:[%s303] sm:$0xff]
        %v362 = vld [vmem:[%s303 + $0x8] sm:$0xff]
        %v363 = vld [vmem:[%s303 + $0x10] sm:$0xff]
        %v364 = vld [vmem:[%s303 + $0x18] sm:$0xff]
        %v365 = vld [vmem:[%s303 + $0x20] sm:$0xff]
        %v366 = vld [vmem:[%s303 + $0x28] sm:$0xff]
        %v367 = vld [vmem:[%s303 + $0x30] sm:$0xff]
        %v368 = vld [vmem:[%s303 + $0x38] sm:$0xff]
        %v369 = vld [vmem:[%s303 + $0x40] sm:$0xff]
        %v370 = vld [vmem:[%s303 + $0x48] sm:$0xff]
        %v371 = vld [vmem:[%s303 + $0x50] sm:$0xff]
        %v372 = vld [vmem:[%s303 + $0x58] sm:$0xff]
        %v373 = vld [vmem:[%s303 + $0x60] sm:$0xff]
        %v374 = vld [vmem:[%s303 + $0x68] sm:$0xff]
        %v375 = vld [vmem:[%s303 + $0x70] sm:$0xff]
        %v376 = vld [vmem:[%s303 + $0x78] sm:$0xff]
        %vm377 = vcmask 556032
        %v378 = vsel %vm377, %v362, 0.0
        %v379 = vadd.f32 %v361, %v378
        %380 = vadd.xlane.f32.xlu0 %v379
        %v381 = vpop.xlane.xlu0 %380
        %v382 = vsel %vm377, %v364, 0.0
        %v383 = vadd.f32 %v363, %v382
        %384 = vadd.xlane.f32.xlu0 %v383
        %v385 = vpop.xlane.xlu0 %384
        %v386 = vsel %vm377, %v366, 0.0
        %v387 = vadd.f32 %v365, %v386
        %388 = vadd.xlane.f32.xlu0 %v387
        %v389 = vpop.xlane.xlu0 %388
        %v390 = vsel %vm377, %v368, 0.0
        %v391 = vadd.f32 %v367, %v390
        %392 = vadd.xlane.f32.xlu0 %v391
        %v393 = vpop.xlane.xlu0 %392
        %v394 = vsel %vm377, %v370, 0.0
        %v395 = vadd.f32 %v369, %v394
        %396 = vadd.xlane.f32.xlu0 %v395
        %v397 = vpop.xlane.xlu0 %396
        %v398 = vsel %vm377, %v372, 0.0
        %v399 = vadd.f32 %v371, %v398
        %400 = vadd.xlane.f32.xlu0 %v399
        %v401 = vpop.xlane.xlu0 %400
        %v402 = vsel %vm377, %v374, 0.0
        %v403 = vadd.f32 %v373, %v402
        %404 = vadd.xlane.f32.xlu0 %v403
        %v405 = vpop.xlane.xlu0 %404
        %v406 = vsel %vm377, %v376, 0.0
        %v407 = vadd.f32 %v375, %v406
        %408 = vadd.xlane.f32.xlu0 %v407
        %v409 = vpop.xlane.xlu0 %408
        %v410 = vadd.f32 %v381, %v397
        %v411 = vadd.f32 %v385, %v401
        %v412 = vadd.f32 %v389, %v405
        %v413 = vadd.f32 %v393, %v409
        %v414 = vmul.f32 %v410, 0.0025510204
        %v415 = vmul.f32 %v411, 0.0025510204
        %v416 = vmul.f32 %v412, 0.0025510204
        %v417 = vmul.f32 %v413, 0.0025510204
        %v418 = vsub.f32 %v361, %v414
        %v419 = vsub.f32 %v362, %v414
        %v420 = vsub.f32 %v363, %v415
        %v421 = vsub.f32 %v364, %v415
        %v422 = vsub.f32 %v365, %v416
        %v423 = vsub.f32 %v366, %v416
        %v424 = vsub.f32 %v367, %v417
        %v425 = vsub.f32 %v368, %v417
        %v426 = vsub.f32 %v369, %v414
        %v427 = vsub.f32 %v370, %v414
        %v428 = vsub.f32 %v371, %v415
        %v429 = vsub.f32 %v372, %v415
        %v430 = vsub.f32 %v373, %v416
        %v431 = vsub.f32 %v374, %v416
        %v432 = vsub.f32 %v375, %v417
        %v433 = vsub.f32 %v376, %v417
        %v434 = vmul.f32 %v418, %v418
        %v435 = vmul.f32 %v419, %v419
        %v436 = vmul.f32 %v420, %v420
        %v437 = vmul.f32 %v421, %v421
        %v438 = vmul.f32 %v422, %v422
        %v439 = vmul.f32 %v423, %v423
        %v440 = vmul.f32 %v424, %v424
        %v441 = vmul.f32 %v425, %v425
        %v442 = vmul.f32 %v426, %v426
        %v443 = vmul.f32 %v427, %v427
        %v444 = vmul.f32 %v428, %v428
        %v445 = vmul.f32 %v429, %v429
        %v446 = vmul.f32 %v430, %v430
        %v447 = vmul.f32 %v431, %v431
        %v448 = vmul.f32 %v432, %v432
        %v449 = vmul.f32 %v433, %v433
        %v450 = vsel %vm377, %v435, 0.0
        %v451 = vadd.f32 %v434, %v450
        %452 = vadd.xlane.f32.xlu0 %v451
        %v453 = vpop.xlane.xlu0 %452
        %v454 = vsel %vm377, %v437, 0.0
        %v455 = vadd.f32 %v436, %v454
        %456 = vadd.xlane.f32.xlu0 %v455
        %v457 = vpop.xlane.xlu0 %456
        %v458 = vsel %vm377, %v439, 0.0
        %v459 = vadd.f32 %v438, %v458
        %460 = vadd.xlane.f32.xlu0 %v459
        %v461 = vpop.xlane.xlu0 %460
        %v462 = vsel %vm377, %v441, 0.0
        %v463 = vadd.f32 %v440, %v462
        %464 = vadd.xlane.f32.xlu0 %v463
        %v465 = vpop.xlane.xlu0 %464
        %v466 = vsel %vm377, %v443, 0.0
        %v467 = vadd.f32 %v442, %v466
        %468 = vadd.xlane.f32.xlu0 %v467
        %v469 = vpop.xlane.xlu0 %468
        %v470 = vsel %vm377, %v445, 0.0
        %v471 = vadd.f32 %v444, %v470
        %472 = vadd.xlane.f32.xlu0 %v471
        %v473 = vpop.xlane.xlu0 %472
        %v474 = vsel %vm377, %v447, 0.0
        %v475 = vadd.f32 %v446, %v474
        %476 = vadd.xlane.f32.xlu0 %v475
        %v477 = vpop.xlane.xlu0 %476
        %v478 = vsel %vm377, %v449, 0.0
        %v479 = vadd.f32 %v448, %v478
        %480 = vadd.xlane.f32.xlu0 %v479
        %v481 = vpop.xlane.xlu0 %480
        %v482 = vadd.f32 %v453, %v469
        %v483 = vadd.f32 %v457, %v473
        %v484 = vadd.f32 %v461, %v477
        %v485 = vadd.f32 %v465, %v481
        %v486 = vmul.f32 %v482, 0.0025510204
        %v487 = vmul.f32 %v483, 0.0025510204
        %v488 = vmul.f32 %v484, 0.0025510204
        %v489 = vmul.f32 %v485, 0.0025510204
        %v490 = vadd.f32 %v486, 1e-05
        %v491 = vadd.f32 %v487, 1e-05
        %v492 = vadd.f32 %v488, 1e-05
        %v493 = vadd.f32 %v489, 1e-05
        %v494 = vrsqrt.pop %v490
        %v495 = vrsqrt.pop %v491
        %v496 = vrsqrt.pop %v492
        %v497 = vrsqrt.pop %v493
        %v498 = vld [vmem:[%s352] sm:$0xff]
        %v499 = vld [vmem:[%s352 + $0x8] sm:$0xff]
        %v500 = vld [vmem:[%s352 + $0x10] sm:$0xff]
        %v501 = vld [vmem:[%s352 + $0x18] sm:$0xff]
        %v502 = vld [vmem:[%s358] sm:$0xff]
        %v503 = vld [vmem:[%s358 + $0x8] sm:$0xff]
        %v504 = vld [vmem:[%s358 + $0x10] sm:$0xff]
        %v505 = vld [vmem:[%s358 + $0x18] sm:$0xff]
        %v506 = vmul.f32 %v498, %v494
        %v507 = vmul.f32 %v499, %v495
        %v508 = vmul.f32 %v500, %v496
        %v509 = vmul.f32 %v501, %v497
        %v510 = vld [vmem:[%s310] sm:$0xff]
        %v511 = vld [vmem:[%s310 + $0x8] sm:$0xff]
        %v512 = vld [vmem:[%s310 + $0x10] sm:$0xff]
        %v513 = vld [vmem:[%s310 + $0x18] sm:$0xff]
        %v514 = vld [vmem:[%s310 + $0x20] sm:$0xff]
        %v515 = vld [vmem:[%s310 + $0x28] sm:$0xff]
        %v516 = vld [vmem:[%s310 + $0x30] sm:$0xff]
        %v517 = vld [vmem:[%s310 + $0x38] sm:$0xff]
        %v518 = vld [vmem:[%s310 + $0x40] sm:$0xff]
        %v519 = vld [vmem:[%s310 + $0x48] sm:$0xff]
        %v520 = vld [vmem:[%s310 + $0x50] sm:$0xff]
        %v521 = vld [vmem:[%s310 + $0x58] sm:$0xff]
        %v522 = vld [vmem:[%s310 + $0x60] sm:$0xff]
        %v523 = vld [vmem:[%s310 + $0x68] sm:$0xff]
        %v524 = vld [vmem:[%s310 + $0x70] sm:$0xff]
        %v525 = vld [vmem:[%s310 + $0x78] sm:$0xff]
        %527 = vset.pattern.permute.xlu0 0
        %528 = vperm.xlu0 %527, %v506
        %v529 = vpop.permute.xlu0 %528
        %532 = vset.pattern.permute.xlu0 0
        %533 = vperm.xlu0 %532, %v507
        %v534 = vpop.permute.xlu0 %533
        %537 = vset.pattern.permute.xlu0 0
        %538 = vperm.xlu0 %537, %v508
        %v539 = vpop.permute.xlu0 %538
        %542 = vset.pattern.permute.xlu0 0
        %543 = vperm.xlu0 %542, %v509
        %v544 = vpop.permute.xlu0 %543
        %v546 = vmul.f32 %v418, %v529
        %v547 = vmul.f32 %v419, %v529
        %v548 = vmul.f32 %v420, %v534
        %v549 = vmul.f32 %v421, %v534
        %v550 = vmul.f32 %v422, %v539
        %v551 = vmul.f32 %v423, %v539
        %v552 = vmul.f32 %v424, %v544
        %v553 = vmul.f32 %v425, %v544
        %v554 = vmul.f32 %v426, %v529
        %v555 = vmul.f32 %v427, %v529
        %v556 = vmul.f32 %v428, %v534
        %v557 = vmul.f32 %v429, %v534
        %v558 = vmul.f32 %v430, %v539
        %v559 = vmul.f32 %v431, %v539
        %v560 = vmul.f32 %v432, %v544
        %v561 = vmul.f32 %v433, %v544
        %563 = vset.pattern.permute.xlu0 0
        %564 = vperm.xlu0 %563, %v502
        %v565 = vpop.permute.xlu0 %564
        %568 = vset.pattern.permute.xlu0 0
        %569 = vperm.xlu0 %568, %v503
        %v570 = vpop.permute.xlu0 %569
        %573 = vset.pattern.permute.xlu0 0
        %574 = vperm.xlu0 %573, %v504
        %v575 = vpop.permute.xlu0 %574
        %578 = vset.pattern.permute.xlu0 0
        %579 = vperm.xlu0 %578, %v505
        %v580 = vpop.permute.xlu0 %579
        %v582 = vadd.f32 %v546, %v565
        %v583 = vadd.f32 %v547, %v565
        %v584 = vadd.f32 %v548, %v570
        %v585 = vadd.f32 %v549, %v570
        %v586 = vadd.f32 %v550, %v575
        %v587 = vadd.f32 %v551, %v575
        %v588 = vadd.f32 %v552, %v580
        %v589 = vadd.f32 %v553, %v580
        %v590 = vadd.f32 %v554, %v565
        %v591 = vadd.f32 %v555, %v565
        %v592 = vadd.f32 %v556, %v570
        %v593 = vadd.f32 %v557, %v570
        %v594 = vadd.f32 %v558, %v575
        %v595 = vadd.f32 %v559, %v575
        %v596 = vadd.f32 %v560, %v580
        %v597 = vadd.f32 %v561, %v580
        %v598 = vadd.f32 %v582, %v510
        %v599 = vadd.f32 %v583, %v511
        %v600 = vadd.f32 %v584, %v512
        %v601 = vadd.f32 %v585, %v513
        %v602 = vadd.f32 %v586, %v514
        %v603 = vadd.f32 %v587, %v515
        %v604 = vadd.f32 %v588, %v516
        %v605 = vadd.f32 %v589, %v517
        %v606 = vadd.f32 %v590, %v518
        %v607 = vadd.f32 %v591, %v519
        %v608 = vadd.f32 %v592, %v520
        %v609 = vadd.f32 %v593, %v521
        %v610 = vadd.f32 %v594, %v522
        %v611 = vadd.f32 %v595, %v523
        %v612 = vadd.f32 %v596, %v524
        %v613 = vadd.f32 %v597, %v525
        %v614 = vmax.f32 %v598, 0.0
        %v615 = vmax.f32 %v599, 0.0
        %v616 = vmax.f32 %v600, 0.0
        %v617 = vmax.f32 %v601, 0.0
        %v618 = vmax.f32 %v602, 0.0
        %v619 = vmax.f32 %v603, 0.0
        %v620 = vmax.f32 %v604, 0.0
        %v621 = vmax.f32 %v605, 0.0
        %v622 = vmax.f32 %v606, 0.0
        %v623 = vmax.f32 %v607, 0.0
        %v624 = vmax.f32 %v608, 0.0
        %v625 = vmax.f32 %v609, 0.0
        %v626 = vmax.f32 %v610, 0.0
        %v627 = vmax.f32 %v611, 0.0
        %v628 = vmax.f32 %v612, 0.0
        %v629 = vmax.f32 %v613, 0.0
        %630 = vst [vmem:[%s345] sm:$0xff] %v614
        %631 = vst.msk [vmem:[%s345 + $0x8] sm:$0xff] %vm377, %v615
        %632 = vst [vmem:[%s345 + $0x10] sm:$0xff] %v616
        %633 = vst.msk [vmem:[%s345 + $0x18] sm:$0xff] %vm377, %v617
        %634 = vst [vmem:[%s345 + $0x20] sm:$0xff] %v618
        %635 = vst.msk [vmem:[%s345 + $0x28] sm:$0xff] %vm377, %v619
        %636 = vst [vmem:[%s345 + $0x30] sm:$0xff] %v620
        %637 = vst.msk [vmem:[%s345 + $0x38] sm:$0xff] %vm377, %v621
        %638 = vst [vmem:[%s345 + $0x40] sm:$0xff] %v622
        %639 = vst.msk [vmem:[%s345 + $0x48] sm:$0xff] %vm377, %v623
        %640 = vst [vmem:[%s345 + $0x50] sm:$0xff] %v624
        %641 = vst.msk [vmem:[%s345 + $0x58] sm:$0xff] %vm377, %v625
        %642 = vst [vmem:[%s345 + $0x60] sm:$0xff] %v626
        %643 = vst.msk [vmem:[%s345 + $0x68] sm:$0xff] %vm377, %v627
        %644 = vst [vmem:[%s345 + $0x70] sm:$0xff] %v628
        %645 = vst.msk [vmem:[%s345 + $0x78] sm:$0xff] %vm377, %v629
        %s646 = sand.u32 %s127, 1
        %s647 = sand.u32 %s127, 1
        %s648 = smul.addr %s647, 128
        %s649 = scalar_lea.vmem [#allocation4], %s648
        // Predicated region
        $region83: #{tpu_custom_call.1} parent=73 // pred_check
          %p650 = pneg %p137
        $region84: #{tpu_custom_call.1} parent=73 // pred_check_branch
          %652 = sbr.rel (%p650) target = $region86
        $region85: #{tpu_custom_call.1} parent=73 // pred_region
          %s653 = smul.u32 4, %s15
          %s654 = smul.addr %s653, 2
          %s655 = smul.addr %s654, 8
          %s656 = scalar_lea.vmem %s4, %s655
          // Predicated region
          $region87: #{tpu_custom_call.1} parent=85 // pred_check
            _
          $region88: #{tpu_custom_call.1} parent=85 // pred_check_branch
            %658 = sbr.rel (0) target = $region90
          $region89: #{tpu_custom_call.1} parent=85 // pred_region
            // Predicated region
            $region91: #{tpu_custom_call.1} parent=89 // pred_check
              _
            $region92: #{tpu_custom_call.1} parent=89 // pred_check_branch
              %660 = sbr.rel (0) target = $region94
            $region93: #{tpu_custom_call.1} parent=89 // pred_region
              loop: start=0, step=1, limit=1
              $region95: #{tpu_custom_call.1} parent=93 // loop_pre_header
                _
              $region96: #{tpu_custom_call.1} parent=93 // loop_header
                %s662 = sphi 0, %s666
                %p663 = scmp.ge.s32.totalorder %s662, 1
                %s667 = sphi %s649, %s649
                %s668 = sphi %s656, %s656
              $region97: #{tpu_custom_call.1} parent=93 // loop_header_branch
                %665 = sbr.rel (%p663) target = $region101
              $region98: #{tpu_custom_call.1} parent=93 // loop_body
                %v669 = vld [vmem:[%s667] sm:$0xff]
                %670 = vst [vmem:[%s668] sm:$0xff] %v669
                %v671 = vld [vmem:[%s667 + $0x8] sm:$0xff]
                %672 = vst [vmem:[%s668 + $0x8] sm:$0xff] %v671
                %v673 = vld [vmem:[%s667 + $0x10] sm:$0xff]
                %674 = vst [vmem:[%s668 + $0x10] sm:$0xff] %v673
                %v675 = vld [vmem:[%s667 + $0x18] sm:$0xff]
                %676 = vst [vmem:[%s668 + $0x18] sm:$0xff] %v675
                %v677 = vld [vmem:[%s667 + $0x20] sm:$0xff]
                %678 = vst [vmem:[%s668 + $0x20] sm:$0xff] %v677
                %v679 = vld [vmem:[%s667 + $0x28] sm:$0xff]
                %680 = vst [vmem:[%s668 + $0x28] sm:$0xff] %v679
                %v681 = vld [vmem:[%s667 + $0x30] sm:$0xff]
                %682 = vst [vmem:[%s668 + $0x30] sm:$0xff] %v681
                %v683 = vld [vmem:[%s667 + $0x38] sm:$0xff]
                %684 = vst [vmem:[%s668 + $0x38] sm:$0xff] %v683
                %v685 = vld [vmem:[%s667 + $0x40] sm:$0xff]
                %686 = vst [vmem:[%s668 + $0x200] sm:$0xff] %v685
                %v687 = vld [vmem:[%s667 + $0x48] sm:$0xff]
                %688 = vst [vmem:[%s668 + $0x208] sm:$0xff] %v687
                %v689 = vld [vmem:[%s667 + $0x50] sm:$0xff]
                %690 = vst [vmem:[%s668 + $0x210] sm:$0xff] %v689
                %v691 = vld [vmem:[%s667 + $0x58] sm:$0xff]
                %692 = vst [vmem:[%s668 + $0x218] sm:$0xff] %v691
                %v693 = vld [vmem:[%s667 + $0x60] sm:$0xff]
                %694 = vst [vmem:[%s668 + $0x220] sm:$0xff] %v693
                %v695 = vld [vmem:[%s667 + $0x68] sm:$0xff]
                %696 = vst [vmem:[%s668 + $0x228] sm:$0xff] %v695
                %v697 = vld [vmem:[%s667 + $0x70] sm:$0xff]
                %698 = vst [vmem:[%s668 + $0x230] sm:$0xff] %v697
                %v699 = vld [vmem:[%s667 + $0x78] sm:$0xff]
                %700 = vst [vmem:[%s668 + $0x238] sm:$0xff] %v699
              $region99: #{tpu_custom_call.1} parent=93 // loop_footer
                %s666 = sadd.s32 1, %s662
              $region100: #{tpu_custom_call.1} parent=93 // loop_footer_branch
                %661 = sbr.rel target = $region96
              $region101: #{tpu_custom_call.1} parent=93 // loop_exit
                _
            $region94: #{tpu_custom_call.1} parent=89 // pred_fallthru
              _
            // Predicated region
            $region102: #{tpu_custom_call.1} parent=89 // pred_check
              _
            $region103: #{tpu_custom_call.1} parent=89 // pred_check_branch
              %702 = sbr.rel target = $region105
            $region104: #{tpu_custom_call.1} parent=89 // pred_region
              _
            $region105: #{tpu_custom_call.1} parent=89 // pred_fallthru
              _
          $region90: #{tpu_custom_call.1} parent=85 // pred_fallthru
            _
          %703 = vnop
        $region86: #{tpu_custom_call.1} parent=73 // pred_fallthru
          _
      $region74: #{tpu_custom_call.1} parent=5 // pred_fallthru
        _
      %p704 = scmp.le.s32.totalorder 2, %s10
      // Predicated region
      $region106: #{tpu_custom_call.1} parent=5 // pred_check
        %p705 = pneg %p704
      $region107: #{tpu_custom_call.1} parent=5 // pred_check_branch
        %707 = sbr.rel (%p705) target = $region109
      $region108: #{tpu_custom_call.1} parent=5 // pred_region
        %s708 = ssub.s32 %s10, 2
        // Predicated region
        $region110: #{tpu_custom_call.1} parent=108 // pred_check
          %p709 = pneg %p143
        $region111: #{tpu_custom_call.1} parent=108 // pred_check_branch
          %711 = sbr.rel (%p709) target = $region113
        $region112: #{tpu_custom_call.1} parent=108 // pred_region
          %s712 = sand.u32 %s128, 1
          %s713 = sand.u32 %s128, 1
          %s714 = smul.addr %s713, 128
          %s715 = scalar_lea.vmem [#allocation4], %s714
        $region113: #{tpu_custom_call.1} parent=108 // pred_fallthru
          _
      $region109: #{tpu_custom_call.1} parent=5 // pred_fallthru
        _
    $region6: #{tpu_custom_call.1} parent=1 // loop_footer
      %s14 = sadd.s32 1, %s10
    $region7: #{tpu_custom_call.1} parent=1 // loop_footer_branch
      %9 = sbr.rel target = $region3
    $region8: #{tpu_custom_call.1} parent=1 // loop_exit
      _

</llo_original>
